<compile_context>
chip_gen: v7x
topology: tpu7x:2x2x1
jax: 0.10.0
libtpu: 0.0.40
codegen_flags: <defaults>
</compile_context>

<pallas_src>
import functools

import jax
import jax.numpy as jnp
from jax.experimental import pallas as pl
from jax.experimental.pallas import tpu as pltpu

# Fold the 9 conv taps into one K = 9*Cin contraction when Cin is small; keep 9 separate MXU
# dots once Cin alone already fills the MXU contraction depth.
_FOLD_MAX_CIN = 64


def _bridge_kernel(x_ref, w1_ref, s1_ref, b1_ref, w2_ref, s2_ref, b2_ref, mask_ref,
                   o_ref, col_ref, *, Wp, P, margin, fold1, fold2):
    # x_ref:    fold1: (1, 9*Cin, P) bf16 wrapper-side im2col;  else (1, Cin, M) bf16 + margin
    # w1_ref:   fold1: (Cmid, 9*Cin) bf16;                      else (9, Cmid, Cin) bf16
    # w2_ref:   fold2: (Cout, 9*Cmid) f32;                      else (9, Cout, Cmid) bf16
    # s*/b*:    (C, 1) f32   folded BN scale / bias (conv bias included)
    # mask_ref: (1, P) bf16  1.0 at interior (valid) positions, 0.0 on halo / lane-pad tail
    # o_ref:    (1, Cout, P) conv2 result in padded flat coords (lane-dense)
    # col_ref:  fold2: (9*Cmid, M) f32 im2col scratch;          else (Cmid, M) bf16 mid scratch
    Cmid = s1_ref.shape[0]
    offs = [(dy - 1) * Wp + (dx - 1) for dy in range(3) for dx in range(3)]

    # One-time scratch zero: the interior read window is fully overwritten every grid step,
    # so only never-written sliver/margin lanes need this (it keeps the discarded halo lanes
    # of the HBM output finite).  Scratch persists across grid iterations.
    @pl.when(pl.program_id(0) == 0)
    def _init_scratch():
        col_ref[...] = jnp.zeros_like(col_ref)

    interior = mask_ref[...]                                            # (1, P) bf16

    # ---- ConvBlock 1: conv3x3 + folded BN + ReLU (interior-masked -> conv2's zero padding) --
    if fold1:
        # Single K = 9*Cin MXU contraction on an aligned, lane-dense operand.
        y1 = jnp.dot(w1_ref[...], x_ref[0], preferred_element_type=jnp.float32)
    else:
        # 9 lane-shifted slices, 9 MXU dots (Cin already fills the MXU contraction).
        y1 = None
        for t, off in enumerate(offs):
            part = jnp.dot(w1_ref[t], x_ref[0, :, margin + off:margin + off + P],
                           preferred_element_type=jnp.float32)
            y1 = part if y1 is None else y1 + part
    y1 = jnp.maximum(y1 * s1_ref[...] + b1_ref[...], 0.0) * interior    # (Cmid, P) f32

    # ---- ConvBlock 2: conv3x3 + folded BN + ReLU ----
    if fold2:
        # Build the K = 9*Cmid im2col operand in VMEM: one lane-shifted copy of y1 per tap,
        # each row block sublane-aligned; then one aligned (9*Cmid, P) MXU contraction.
        for t, off in enumerate(offs):
            col_ref[t * Cmid:(t + 1) * Cmid, margin - off:margin - off + P] = y1
        y2 = jnp.dot(w2_ref[...], col_ref[:, margin:margin + P],
                     preferred_element_type=jnp.float32)
    else:
        # Lane-aligned single store of the intermediate, then 9 shifted-slice MXU dots.
        col_ref[:, margin:margin + P] = y1.astype(col_ref.dtype)
        y2 = None
        for t, off in enumerate(offs):
            part = jnp.dot(w2_ref[t], col_ref[:, margin + off:margin + off + P],
                           preferred_element_type=jnp.float32)
            y2 = part if y2 is None else y2 + part
    y2 = jnp.maximum(y2 * s2_ref[...] + b2_ref[...], 0.0)

    # Lane-dense store; halo / lane-pad-tail columns are sliced off by the wrapper.
    o_ref[0] = y2.astype(o_ref.dtype)


def bridge_forward(x_nchw, params1, params2, out_dtype=jnp.bfloat16):
    """Bridge.forward: two ConvBlocks (Conv3x3(pad=1) -> BN(eval) -> ReLU).  NCHW in/out.

    Returns `out_dtype` (bf16 by default: downstream convs consume bf16 and it halves the
    HBM writeback; pass jnp.float32 to match the PyTorch dtype exactly).
    """
    N, Cin, H, W = x_nchw.shape
    Cmid = params1["w"].shape[-1]
    Cout = params2["w"].shape[-1]
    Hp, Wp = H + 2, W + 2
    P_valid = Hp * Wp                                  # flattened padded spatial size
    P = -(-P_valid // 128) * 128                       # lane-dense: round up to 128 lanes
    margin = -(-(Wp + 1) // 128) * 128                 # >= Wp+1 and 128-aligned
    M = P + 2 * margin

    fold1 = Cin <= _FOLD_MAX_CIN
    fold2 = Cmid <= _FOLD_MAX_CIN

    offs = [(dy - 1) * Wp + (dx - 1) for dy in range(3) for dx in range(3)]

    # Flattened, spatially zero-padded input with zero margins / tail on the lane axis.
    x_flat = jnp.pad(x_nchw, ((0, 0), (0, 0), (1, 1), (1, 1))).reshape(N, Cin, P_valid)
    x_m = jnp.pad(x_flat, ((0, 0), (0, 0), (margin, margin + P - P_valid))
                  ).astype(jnp.bfloat16)
    if fold1:
        # Wrapper-side im2col for conv1 (cheap at small Cin); one fused XLA concat of slices.
        x_in = jnp.concatenate([x_m[:, :, margin + o:margin + o + P] for o in offs], axis=1)
        x_spec = pl.BlockSpec((1, 9 * Cin, P), lambda n: (n, 0, 0))
    else:
        x_in = x_m
        x_spec = pl.BlockSpec((1, Cin, M), lambda n: (n, 0, 0))

    def prep_w(w_hwio, folded, dtype):                 # (3,3,Ci,Co) -> MXU layout
        ci, co = w_hwio.shape[2], w_hwio.shape[3]
        if folded:
            return jnp.transpose(w_hwio, (3, 0, 1, 2)).reshape(co, 9 * ci).astype(dtype)
        return jnp.transpose(w_hwio, (0, 1, 3, 2)).reshape(9, co, ci).astype(dtype)

    def prep_sb(v):
        return v.reshape(-1, 1).astype(jnp.float32)

    w1 = prep_w(params1["w"], fold1, jnp.bfloat16)
    # The folded conv2 stacks its K operand in an f32 VMEM scratch (sublane-aligned row
    # blocks), so its weight stays f32; the unfolded production path keeps bf16 MXU operands.
    w2 = prep_w(params2["w"], fold2, jnp.float32 if fold2 else jnp.bfloat16)

    # Interior mask: 1 at valid output positions, 0 on the 1-pixel halo and the lane-pad tail.
    mask = jnp.pad(jnp.ones((H, W), jnp.float32), ((1, 1), (1, 1))).reshape(1, P_valid)
    mask = jnp.pad(mask, ((0, 0), (0, P - P_valid))).astype(jnp.bfloat16)

    col_scratch = (pltpu.VMEM((9 * Cmid, M), jnp.float32) if fold2
                   else pltpu.VMEM((Cmid, M), jnp.bfloat16))

    kernel = functools.partial(_bridge_kernel, Wp=Wp, P=P, margin=margin,
                               fold1=fold1, fold2=fold2)

    out_flat = pl.pallas_call(
        kernel,
        out_shape=jax.ShapeDtypeStruct((N, Cout, P), out_dtype),
        grid_spec=pltpu.PrefetchScalarGridSpec(
            num_scalar_prefetch=0,
            grid=(N,),
            in_specs=[
                x_spec,
                pl.BlockSpec(w1.shape, lambda n: (0,) * w1.ndim),
                pl.BlockSpec((Cmid, 1), lambda n: (0, 0)),
                pl.BlockSpec((Cmid, 1), lambda n: (0, 0)),
                pl.BlockSpec(w2.shape, lambda n: (0,) * w2.ndim),
                pl.BlockSpec((Cout, 1), lambda n: (0, 0)),
                pl.BlockSpec((Cout, 1), lambda n: (0, 0)),
                pl.BlockSpec((1, P), lambda n: (0, 0)),
            ],
            out_specs=pl.BlockSpec((1, Cout, P), lambda n: (n, 0, 0)),
            scratch_shapes=[col_scratch],
        ),
        compiler_params=pltpu.CompilerParams(
            dimension_semantics=("parallel",)),
    )(x_in, w1, prep_sb(params1["scale"]), prep_sb(params1["bias"]),
      w2, prep_sb(params2["scale"]), prep_sb(params2["bias"]), mask)

    # Drop the lane-pad tail and the 1-pixel halo; slice + reshape fuse into one small XLA op.
    return out_flat[:, :, :P_valid].reshape(N, Cout, Hp, Wp)[:, :, 1:-1, 1:-1]


def make_convblock_params(key, in_channels, out_channels):
    """Deterministic synthetic parameters matching ConvBlock's shapes (eval-mode BN folded)."""
    k1, k2, k3, k4, k5, k6 = jax.random.split(key, 6)
    conv_w = jax.random.normal(k1, (3, 3, in_channels, out_channels),
                               jnp.float32) * 0.1          # HWIO
    conv_b = jax.random.normal(k2, (out_channels,), jnp.float32) * 0.1
    bn_gamma = 1.0 + 0.1 * jax.random.normal(k3, (out_channels,), jnp.float32)
    bn_beta = 0.1 * jax.random.normal(k4, (out_channels,), jnp.float32)
    bn_mean = 0.05 * jax.random.normal(k5, (out_channels,), jnp.float32)
    bn_var = jnp.abs(1.0 + 0.1 * jax.random.normal(k6, (out_channels,), jnp.float32))
    eps = 1e-5
    scale = bn_gamma / jnp.sqrt(bn_var + eps)
    bias = (conv_b - bn_mean) * scale + bn_beta              # conv bias folded in
    return dict(w=conv_w, scale=scale, bias=bias)


def _reference_forward(x_nchw, params1, params2):
    """Pure-JAX f32 reference (lax conv) for correctness checking."""
    def block(x, p):
        y = jax.lax.conv_general_dilated(
            x, p["w"], window_strides=(1, 1), padding=((1, 1), (1, 1)),
            dimension_numbers=("NCHW", "HWIO", "NCHW"),
            precision=jax.lax.Precision.HIGHEST)
        y = y * p["scale"][None, :, None, None] + p["bias"][None, :, None, None]
        return jnp.maximum(y, 0.0)
    return block(block(x_nchw, params1), params2)


if __name__ == "__main__":
    key = jax.random.PRNGKey(0)
    kx, kp1, kp2 = jax.random.split(key, 3)

    N, C_in, C_out, H, W = 2, 4, 8, 16, 16
    x = jax.random.normal(kx, (N, C_in, H, W), jnp.float32)

    params1 = make_convblock_params(kp1, C_in, C_out)
    params2 = make_convblock_params(kp2, C_out, C_out)

    out = jax.block_until_ready(bridge_forward(x, params1, params2))
    ref = jax.block_until_ready(_reference_forward(x, params1, params2))

    assert out.shape == (N, C_out, H, W)
    assert out.dtype == jnp.bfloat16
    # bf16 MXU operands and bf16 output with f32 accumulation -> relaxed tolerance vs f32 ref.
    assert jnp.allclose(out.astype(jnp.float32), ref, atol=3e-2, rtol=3e-2), \
        "mismatch vs reference"

    print("KERNEL_OK")
</pallas_src>

<mosaic_0001>
module attributes {stable_mosaic.version = 11 : i64} {
  func.func @_bridge_kernel(%arg0: i32, %arg1: memref<1x36x384xbf16, #tpu.memory_space<vmem>>, %arg2: memref<8x36xbf16, #tpu.memory_space<vmem>>, %arg3: memref<8x1xf32, #tpu.memory_space<vmem>>, %arg4: memref<8x1xf32, #tpu.memory_space<vmem>>, %arg5: memref<8x72xf32, #tpu.memory_space<vmem>>, %arg6: memref<8x1xf32, #tpu.memory_space<vmem>>, %arg7: memref<8x1xf32, #tpu.memory_space<vmem>>, %arg8: memref<1x384xbf16, #tpu.memory_space<vmem>>, %arg9: memref<1x8x384xbf16, #tpu.memory_space<vmem>>, %arg10: memref<72x640xf32, #tpu.memory_space<vmem>>) attributes {dimension_semantics = [#tpu.dimension_semantics<parallel>], iteration_bounds = array<i64: 2>, scalar_prefetch = 0 : i64, scratch_operands = 1 : i64, tpu.core_type = #tpu.core_type<tc>, window_params = [{transform_indices = @transform_0, window_bounds = array<i64: 1, 36, 384>}, {pipeline_mode = #tpu.pipeline_mode<synchronous>, transform_indices = @transform_1, window_bounds = array<i64: 8, 36>}, {pipeline_mode = #tpu.pipeline_mode<synchronous>, transform_indices = @transform_2, window_bounds = array<i64: 8, 1>}, {pipeline_mode = #tpu.pipeline_mode<synchronous>, transform_indices = @transform_3, window_bounds = array<i64: 8, 1>}, {pipeline_mode = #tpu.pipeline_mode<synchronous>, transform_indices = @transform_4, window_bounds = array<i64: 8, 72>}, {pipeline_mode = #tpu.pipeline_mode<synchronous>, transform_indices = @transform_5, window_bounds = array<i64: 8, 1>}, {pipeline_mode = #tpu.pipeline_mode<synchronous>, transform_indices = @transform_6, window_bounds = array<i64: 8, 1>}, {pipeline_mode = #tpu.pipeline_mode<synchronous>, transform_indices = @transform_7, window_bounds = array<i64: 1, 384>}, {transform_indices = @transform_8, window_bounds = array<i64: 1, 8, 384>}]} {
    %c0_i32 = arith.constant 0 : i32
    %0 = arith.cmpi eq, %arg0, %c0_i32 : i32
    %1 = arith.extui %0 : i1 to i32
    %c0_i32_0 = arith.constant 0 : i32
    %2 = arith.cmpi ne, %1, %c0_i32_0 : i32
    scf.if %2 {
      %cst_26 = arith.constant 0.000000e+00 : f32
      %43 = vector.broadcast %cst_26 : f32 to vector<72x640xf32>
      %c0_27 = arith.constant 0 : index
      %c0_28 = arith.constant 0 : index
      %44 = vector.load %arg10[%c0_27, %c0_28] : memref<72x640xf32, #tpu.memory_space<vmem>>, vector<72x640xf32>
      tpu.vector_store %arg10[%c0_27, %c0_28], %43 {strides = array<i32>} : memref<72x640xf32, #tpu.memory_space<vmem>>, vector<72x640xf32>,
    } else {
    }
    %c0 = arith.constant 0 : index
    %c0_1 = arith.constant 0 : index
    %3 = vector.load %arg8[%c0, %c0_1] : memref<1x384xbf16, #tpu.memory_space<vmem>>, vector<1x384xbf16>
    %c0_2 = arith.constant 0 : index
    %c0_3 = arith.constant 0 : index
    %4 = vector.load %arg2[%c0_2, %c0_3] : memref<8x36xbf16, #tpu.memory_space<vmem>>, vector<8x36xbf16>
    %c0_4 = arith.constant 0 : index
    %c0_5 = arith.constant 0 : index
    %c0_6 = arith.constant 0 : index
    %5 = vector.load %arg1[%c0_4, %c0_5, %c0_6] : memref<1x36x384xbf16, #tpu.memory_space<vmem>>, vector<1x36x384xbf16>
    %6 = vector.shape_cast %5 : vector<1x36x384xbf16> to vector<36x384xbf16>
    %cst = arith.constant dense<0.000000e+00> : vector<8x384xf32>
    %7 = tpu.matmul %4, %6, %cst {dimension_numbers = #tpu.dot_dimension_numbers<[1], [0], [0], [1], [0, 0, 1, 1], [], []>} : vector<8x36xbf16>, vector<36x384xbf16>, vector<8x384xf32> -> vector<8x384xf32>
    %c0_7 = arith.constant 0 : index
    %c0_8 = arith.constant 0 : index
    %8 = vector.load %arg3[%c0_7, %c0_8] : memref<8x1xf32, #tpu.memory_space<vmem>>, vector<8x1xf32>
    %9 = vector.broadcast %8 : vector<8x1xf32> to vector<8x384xf32>
    %10 = arith.mulf %7, %9 : vector<8x384xf32>
    %c0_9 = arith.constant 0 : index
    %c0_10 = arith.constant 0 : index
    %11 = vector.load %arg4[%c0_9, %c0_10] : memref<8x1xf32, #tpu.memory_space<vmem>>, vector<8x1xf32>
    %12 = vector.broadcast %11 : vector<8x1xf32> to vector<8x384xf32>
    %13 = arith.addf %10, %12 : vector<8x384xf32>
    %cst_11 = arith.constant 0.000000e+00 : f32
    %14 = vector.broadcast %cst_11 : f32 to vector<8x384xf32>
    %15 = arith.maximumf %13, %14 : vector<8x384xf32>
    %16 = arith.extf %3 : vector<1x384xbf16> to vector<1x384xf32>
    %17 = vector.broadcast %16 : vector<1x384xf32> to vector<8x384xf32>
    %18 = arith.mulf %15, %17 : vector<8x384xf32>
    %c0_12 = arith.constant 0 : index
    %c147 = arith.constant 147 : index
    %19 = vector.load %arg10[%c0_12, %c147] : memref<72x640xf32, #tpu.memory_space<vmem>>, vector<8x384xf32>
    tpu.vector_store %arg10[%c0_12, %c147], %18 {strides = array<i32>} : memref<72x640xf32, #tpu.memory_space<vmem>>, vector<8x384xf32>,
    %c8 = arith.constant 8 : index
    %c146 = arith.constant 146 : index
    %20 = vector.load %arg10[%c8, %c146] : memref<72x640xf32, #tpu.memory_space<vmem>>, vector<8x384xf32>
    tpu.vector_store %arg10[%c8, %c146], %18 {strides = array<i32>} : memref<72x640xf32, #tpu.memory_space<vmem>>, vector<8x384xf32>,
    %c16 = arith.constant 16 : index
    %c145 = arith.constant 145 : index
    %21 = vector.load %arg10[%c16, %c145] : memref<72x640xf32, #tpu.memory_space<vmem>>, vector<8x384xf32>
    tpu.vector_store %arg10[%c16, %c145], %18 {strides = array<i32>} : memref<72x640xf32, #tpu.memory_space<vmem>>, vector<8x384xf32>,
    %c24 = arith.constant 24 : index
    %c129 = arith.constant 129 : index
    %22 = vector.load %arg10[%c24, %c129] : memref<72x640xf32, #tpu.memory_space<vmem>>, vector<8x384xf32>
    tpu.vector_store %arg10[%c24, %c129], %18 {strides = array<i32>} : memref<72x640xf32, #tpu.memory_space<vmem>>, vector<8x384xf32>,
    %c32 = arith.constant 32 : index
    %c128 = arith.constant 128 : index
    %23 = vector.load %arg10[%c32, %c128] : memref<72x640xf32, #tpu.memory_space<vmem>>, vector<8x384xf32>
    tpu.vector_store %arg10[%c32, %c128], %18 {strides = array<i32>} : memref<72x640xf32, #tpu.memory_space<vmem>>, vector<8x384xf32>,
    %c40 = arith.constant 40 : index
    %c127 = arith.constant 127 : index
    %24 = vector.load %arg10[%c40, %c127] : memref<72x640xf32, #tpu.memory_space<vmem>>, vector<8x384xf32>
    tpu.vector_store %arg10[%c40, %c127], %18 {strides = array<i32>} : memref<72x640xf32, #tpu.memory_space<vmem>>, vector<8x384xf32>,
    %c48 = arith.constant 48 : index
    %c111 = arith.constant 111 : index
    %25 = vector.load %arg10[%c48, %c111] : memref<72x640xf32, #tpu.memory_space<vmem>>, vector<8x384xf32>
    tpu.vector_store %arg10[%c48, %c111], %18 {strides = array<i32>} : memref<72x640xf32, #tpu.memory_space<vmem>>, vector<8x384xf32>,
    %c56 = arith.constant 56 : index
    %c110 = arith.constant 110 : index
    %26 = vector.load %arg10[%c56, %c110] : memref<72x640xf32, #tpu.memory_space<vmem>>, vector<8x384xf32>
    tpu.vector_store %arg10[%c56, %c110], %18 {strides = array<i32>} : memref<72x640xf32, #tpu.memory_space<vmem>>, vector<8x384xf32>,
    %c64 = arith.constant 64 : index
    %c109 = arith.constant 109 : index
    %27 = vector.load %arg10[%c64, %c109] : memref<72x640xf32, #tpu.memory_space<vmem>>, vector<8x384xf32>
    tpu.vector_store %arg10[%c64, %c109], %18 {strides = array<i32>} : memref<72x640xf32, #tpu.memory_space<vmem>>, vector<8x384xf32>,
    %c0_13 = arith.constant 0 : index
    %c0_14 = arith.constant 0 : index
    %28 = vector.load %arg5[%c0_13, %c0_14] : memref<8x72xf32, #tpu.memory_space<vmem>>, vector<8x72xf32>
    %c0_15 = arith.constant 0 : index
    %c128_16 = arith.constant 128 : index
    %29 = vector.load %arg10[%c0_15, %c128_16] : memref<72x640xf32, #tpu.memory_space<vmem>>, vector<72x384xf32>
    %cst_17 = arith.constant dense<0.000000e+00> : vector<8x384xf32>
    %30 = tpu.matmul %28, %29, %cst_17 {dimension_numbers = #tpu.dot_dimension_numbers<[1], [0], [0], [1], [0, 0, 1, 1], [], []>} : vector<8x72xf32>, vector<72x384xf32>, vector<8x384xf32> -> vector<8x384xf32>
    %c0_18 = arith.constant 0 : index
    %c0_19 = arith.constant 0 : index
    %31 = vector.load %arg6[%c0_18, %c0_19] : memref<8x1xf32, #tpu.memory_space<vmem>>, vector<8x1xf32>
    %32 = vector.broadcast %31 : vector<8x1xf32> to vector<8x384xf32>
    %33 = arith.mulf %30, %32 : vector<8x384xf32>
    %c0_20 = arith.constant 0 : index
    %c0_21 = arith.constant 0 : index
    %34 = vector.load %arg7[%c0_20, %c0_21] : memref<8x1xf32, #tpu.memory_space<vmem>>, vector<8x1xf32>
    %35 = vector.broadcast %34 : vector<8x1xf32> to vector<8x384xf32>
    %36 = arith.addf %33, %35 : vector<8x384xf32>
    %cst_22 = arith.constant 0.000000e+00 : f32
    %37 = vector.broadcast %cst_22 : f32 to vector<8x384xf32>
    %38 = arith.maximumf %36, %37 : vector<8x384xf32>
    %39 = arith.truncf %38 : vector<8x384xf32> to vector<8x384xbf16>
    %c0_23 = arith.constant 0 : index
    %c0_24 = arith.constant 0 : index
    %c0_25 = arith.constant 0 : index
    %40 = vector.load %arg9[%c0_23, %c0_24, %c0_25] : memref<1x8x384xbf16, #tpu.memory_space<vmem>>, vector<1x8x384xbf16>
    %41 = vector.shape_cast %40 : vector<1x8x384xbf16> to vector<8x384xbf16>
    %42 = vector.shape_cast %39 : vector<8x384xbf16> to vector<1x8x384xbf16>
    tpu.vector_store %arg9[%c0_23, %c0_24, %c0_25], %42 {strides = array<i32>} : memref<1x8x384xbf16, #tpu.memory_space<vmem>>, vector<1x8x384xbf16>,
    return
  }
  func.func @transform_0(%arg0: i32) -> (i32, i32, i32) {
    %c0_i32 = arith.constant 0 : i32
    %c0_i32_0 = arith.constant 0 : i32
    %c0_i32_1 = arith.constant 0 : i32
    return %arg0, %c0_i32, %c0_i32_0 : i32, i32, i32
  }
  func.func @transform_1(%arg0: i32) -> (i32, i32) {
    %c0_i32 = arith.constant 0 : i32
    %c0_i32_0 = arith.constant 0 : i32
    %c0_i32_1 = arith.constant 0 : i32
    return %c0_i32, %c0_i32_0 : i32, i32
  }
  func.func @transform_2(%arg0: i32) -> (i32, i32) {
    %c0_i32 = arith.constant 0 : i32
    %c0_i32_0 = arith.constant 0 : i32
    %c0_i32_1 = arith.constant 0 : i32
    return %c0_i32, %c0_i32_0 : i32, i32
  }
  func.func @transform_3(%arg0: i32) -> (i32, i32) {
    %c0_i32 = arith.constant 0 : i32
    %c0_i32_0 = arith.constant 0 : i32
    %c0_i32_1 = arith.constant 0 : i32
    return %c0_i32, %c0_i32_0 : i32, i32
  }
  func.func @transform_4(%arg0: i32) -> (i32, i32) {
    %c0_i32 = arith.constant 0 : i32
    %c0_i32_0 = arith.constant 0 : i32
    %c0_i32_1 = arith.constant 0 : i32
    return %c0_i32, %c0_i32_0 : i32, i32
  }
  func.func @transform_5(%arg0: i32) -> (i32, i32) {
    %c0_i32 = arith.constant 0 : i32
    %c0_i32_0 = arith.constant 0 : i32
    %c0_i32_1 = arith.constant 0 : i32
    return %c0_i32, %c0_i32_0 : i32, i32
  }
  func.func @transform_6(%arg0: i32) -> (i32, i32) {
    %c0_i32 = arith.constant 0 : i32
    %c0_i32_0 = arith.constant 0 : i32
    %c0_i32_1 = arith.constant 0 : i32
    return %c0_i32, %c0_i32_0 : i32, i32
  }
  func.func @transform_7(%arg0: i32) -> (i32, i32) {
    %c0_i32 = arith.constant 0 : i32
    %c0_i32_0 = arith.constant 0 : i32
    %c0_i32_1 = arith.constant 0 : i32
    return %c0_i32, %c0_i32_0 : i32, i32
  }
  func.func @transform_8(%arg0: i32) -> (i32, i32, i32) {
    %c0_i32 = arith.constant 0 : i32
    %c0_i32_0 = arith.constant 0 : i32
    %c0_i32_1 = arith.constant 0 : i32
    return %arg0, %c0_i32, %c0_i32_0 : i32, i32, i32
  }
}

</mosaic_0001>

<llo_original>
// kernel: tpu_custom_call.1
$region0: #{tpu_custom_call.1}
  #allocation0 [shape = 'u32[]', space=smem, size = 0x4, offset = 0x4, fixed_abs, tag = 'smem constant byte address 0x4 - core index']
  #allocation1 [shape = 'u32[144,128]{1,0:T(1,128)}', space=vmem, size = 0x12000, scoped, tag = 'internal scratch']
  #allocation2 [shape = 'f32[72,640]{1,0:T(8,128)}', space=vmem, size = 0x2d000, scoped, tag = 'scratch operand']
  %s0 = inlined_call_operand.vmem [shape: bf16[2,36,384], index: 0, kind: input, shape index: {}]
  %s1 = inlined_call_operand.vmem [shape: bf16[8,36], index: 1, kind: input, shape index: {}]
  %s2 = inlined_call_operand.vmem [shape: f32[8,1], index: 2, kind: input, shape index: {}]
  %s3 = inlined_call_operand.vmem [shape: f32[8,1], index: 3, kind: input, shape index: {}]
  %s4 = inlined_call_operand.vmem [shape: f32[8,72], index: 4, kind: input, shape index: {}]
  %s5 = inlined_call_operand.vmem [shape: f32[8,1], index: 5, kind: input, shape index: {}]
  %s6 = inlined_call_operand.vmem [shape: f32[8,1], index: 6, kind: input, shape index: {}]
  %s7 = inlined_call_operand.vmem [shape: bf16[1,384], index: 7, kind: input, shape index: {}]
  %s8 = inlined_call_operand.hbm [shape: bf16[2,8,384], index: 8, kind: output, shape index: {}]
  %s9 = sld [smem:[#allocation0]]
  $region69: #{tpu_custom_call.1} parent=0
    _
  %s11 = ssub.s32 1, %s9
  %s12 = scalar_select 0, %s11, %s9
  $region1: #{tpu_custom_call.1} parent=0
    #allocation3 [shape = 'u8[12288]{0}', space=vmem, size = 0x3000, scoped, tag = 'output window, operand 0']
    #allocation4 [shape = 's32[2]{0}', space=sflag, size = 0x8, scoped, tag = 'scoped memory for tpu_custom_call.1']
    %13 = vsyncpa [#allocation4], 0
    %s14 = scalar_lea.sflag [#allocation4], 1
    %15 = vsyncpa %s14, 0
    loop: start=0, step=1, limit=4
    $region2: #{tpu_custom_call.1} parent=1 // loop_pre_header
      _
    $region3: #{tpu_custom_call.1} parent=1 // loop_header
      %s17 = sphi 0, %s21
      %p18 = scmp.ge.s32.totalorder %s17, 4
      %s27 = sphi 0, %s29
      %s30 = sphi 0, %s27
      %s31 = sphi 0, %s30
      %s47 = sphi 0, %s31
      %s51 = sphi 0, %s51
      %s53 = sphi 0, %s51
      %s54 = sphi 0, %s53
      %s68 = sphi 0, %s54
      %s72 = sphi 0, %s72
      %s74 = sphi 0, %s72
      %s75 = sphi 0, %s74
      %s89 = sphi 0, %s75
      %s93 = sphi 0, %s93
      %s95 = sphi 0, %s93
      %s96 = sphi 0, %s95
      %s110 = sphi 0, %s96
      %s114 = sphi 0, %s114
      %s116 = sphi 0, %s114
      %s117 = sphi 0, %s116
      %s131 = sphi 0, %s117
      %s135 = sphi 0, %s135
      %s137 = sphi 0, %s135
      %s138 = sphi 0, %s137
      %s152 = sphi 0, %s138
      %s156 = sphi 0, %s156
      %s158 = sphi 0, %s156
      %s159 = sphi 0, %s158
      %s173 = sphi 0, %s159
      %s177 = sphi 0, %s177
      %s179 = sphi 0, %s177
      %s180 = sphi 0, %s179
      %s194 = sphi 0, %s180
      %s200 = sphi 0, %s202
      %s203 = sphi 0, %s200
      %s204 = sphi 0, %s203
      %s220 = sphi 0, %s204
    $region4: #{tpu_custom_call.1} parent=1 // loop_header_branch
      %20 = sbr.rel (%p18) target = $region8
    $region5: #{tpu_custom_call.1} parent=1 // loop_body
      %s22 = ssub.s32 %s17, 1
      %s23 = ssub.s32 %s17, 2
      %s24 = sadd.s32 %s17, 1
      %s25 = ssub.s32 %s17, %s24
      %p26 = scmp.eq.s32.totalorder %s25, 0
      %s28 = sadd.s32 %s27, 1
      %s29 = scalar_select %p26, %s27, %s28
      %p32 = pneg %p26
      %p33 = scmp.eq.s32.totalorder %s17, 1
      %p34 = por %p32, %p33
      %p35 = scmp.ne.s32.totalorder %s27, %s30
      %p36 = scmp.eq.s32.totalorder %s17, 0
      %p37 = por %p35, %p36
      %p38 = scmp.ne.s32.totalorder %s27, %s30
      %p39 = scmp.eq.s32.totalorder %s22, 1
      %p40 = por %p38, %p39
      %p41 = scmp.ne.s32.totalorder %s30, %s31
      %p42 = scmp.eq.s32.totalorder %s22, 0
      %p43 = por %p41, %p42
      %p44 = scmp.ne.s32.totalorder %s30, %s31
      %p45 = scmp.eq.s32.totalorder %s23, 1
      %p46 = por %p44, %p45
      %p48 = scmp.ne.s32.totalorder %s31, %s47
      %p49 = scmp.eq.s32.totalorder %s23, 0
      %p50 = por %p48, %p49
      %s52 = sadd.s32 %s51, 1
      %p55 = scmp.eq.s32.totalorder %s17, 1
      %p56 = scmp.ne.s32.totalorder %s51, %s53
      %p57 = scmp.eq.s32.totalorder %s17, 0
      %p58 = por %p56, %p57
      %p59 = scmp.ne.s32.totalorder %s51, %s53
      %p60 = scmp.eq.s32.totalorder %s22, 1
      %p61 = por %p59, %p60
      %p62 = scmp.ne.s32.totalorder %s53, %s54
      %p63 = scmp.eq.s32.totalorder %s22, 0
      %p64 = por %p62, %p63
      %p65 = scmp.ne.s32.totalorder %s53, %s54
      %p66 = scmp.eq.s32.totalorder %s23, 1
      %p67 = por %p65, %p66
      %p69 = scmp.ne.s32.totalorder %s54, %s68
      %p70 = scmp.eq.s32.totalorder %s23, 0
      %p71 = por %p69, %p70
      %s73 = sadd.s32 %s72, 1
      %p76 = scmp.eq.s32.totalorder %s17, 1
      %p77 = scmp.ne.s32.totalorder %s72, %s74
      %p78 = scmp.eq.s32.totalorder %s17, 0
      %p79 = por %p77, %p78
      %p80 = scmp.ne.s32.totalorder %s72, %s74
      %p81 = scmp.eq.s32.totalorder %s22, 1
      %p82 = por %p80, %p81
      %p83 = scmp.ne.s32.totalorder %s74, %s75
      %p84 = scmp.eq.s32.totalorder %s22, 0
      %p85 = por %p83, %p84
      %p86 = scmp.ne.s32.totalorder %s74, %s75
      %p87 = scmp.eq.s32.totalorder %s23, 1
      %p88 = por %p86, %p87
      %p90 = scmp.ne.s32.totalorder %s75, %s89
      %p91 = scmp.eq.s32.totalorder %s23, 0
      %p92 = por %p90, %p91
      %s94 = sadd.s32 %s93, 1
      %p97 = scmp.eq.s32.totalorder %s17, 1
      %p98 = scmp.ne.s32.totalorder %s93, %s95
      %p99 = scmp.eq.s32.totalorder %s17, 0
      %p100 = por %p98, %p99
      %p101 = scmp.ne.s32.totalorder %s93, %s95
      %p102 = scmp.eq.s32.totalorder %s22, 1
      %p103 = por %p101, %p102
      %p104 = scmp.ne.s32.totalorder %s95, %s96
      %p105 = scmp.eq.s32.totalorder %s22, 0
      %p106 = por %p104, %p105
      %p107 = scmp.ne.s32.totalorder %s95, %s96
      %p108 = scmp.eq.s32.totalorder %s23, 1
      %p109 = por %p107, %p108
      %p111 = scmp.ne.s32.totalorder %s96, %s110
      %p112 = scmp.eq.s32.totalorder %s23, 0
      %p113 = por %p111, %p112
      %s115 = sadd.s32 %s114, 1
      %p118 = scmp.eq.s32.totalorder %s17, 1
      %p119 = scmp.ne.s32.totalorder %s114, %s116
      %p120 = scmp.eq.s32.totalorder %s17, 0
      %p121 = por %p119, %p120
      %p122 = scmp.ne.s32.totalorder %s114, %s116
      %p123 = scmp.eq.s32.totalorder %s22, 1
      %p124 = por %p122, %p123
      %p125 = scmp.ne.s32.totalorder %s116, %s117
      %p126 = scmp.eq.s32.totalorder %s22, 0
      %p127 = por %p125, %p126
      %p128 = scmp.ne.s32.totalorder %s116, %s117
      %p129 = scmp.eq.s32.totalorder %s23, 1
      %p130 = por %p128, %p129
      %p132 = scmp.ne.s32.totalorder %s117, %s131
      %p133 = scmp.eq.s32.totalorder %s23, 0
      %p134 = por %p132, %p133
      %s136 = sadd.s32 %s135, 1
      %p139 = scmp.eq.s32.totalorder %s17, 1
      %p140 = scmp.ne.s32.totalorder %s135, %s137
      %p141 = scmp.eq.s32.totalorder %s17, 0
      %p142 = por %p140, %p141
      %p143 = scmp.ne.s32.totalorder %s135, %s137
      %p144 = scmp.eq.s32.totalorder %s22, 1
      %p145 = por %p143, %p144
      %p146 = scmp.ne.s32.totalorder %s137, %s138
      %p147 = scmp.eq.s32.totalorder %s22, 0
      %p148 = por %p146, %p147
      %p149 = scmp.ne.s32.totalorder %s137, %s138
      %p150 = scmp.eq.s32.totalorder %s23, 1
      %p151 = por %p149, %p150
      %p153 = scmp.ne.s32.totalorder %s138, %s152
      %p154 = scmp.eq.s32.totalorder %s23, 0
      %p155 = por %p153, %p154
      %s157 = sadd.s32 %s156, 1
      %p160 = scmp.eq.s32.totalorder %s17, 1
      %p161 = scmp.ne.s32.totalorder %s156, %s158
      %p162 = scmp.eq.s32.totalorder %s17, 0
      %p163 = por %p161, %p162
      %p164 = scmp.ne.s32.totalorder %s156, %s158
      %p165 = scmp.eq.s32.totalorder %s22, 1
      %p166 = por %p164, %p165
      %p167 = scmp.ne.s32.totalorder %s158, %s159
      %p168 = scmp.eq.s32.totalorder %s22, 0
      %p169 = por %p167, %p168
      %p170 = scmp.ne.s32.totalorder %s158, %s159
      %p171 = scmp.eq.s32.totalorder %s23, 1
      %p172 = por %p170, %p171
      %p174 = scmp.ne.s32.totalorder %s159, %s173
      %p175 = scmp.eq.s32.totalorder %s23, 0
      %p176 = por %p174, %p175
      %s178 = sadd.s32 %s177, 1
      %p181 = scmp.eq.s32.totalorder %s17, 1
      %p182 = scmp.ne.s32.totalorder %s177, %s179
      %p183 = scmp.eq.s32.totalorder %s17, 0
      %p184 = por %p182, %p183
      %p185 = scmp.ne.s32.totalorder %s177, %s179
      %p186 = scmp.eq.s32.totalorder %s22, 1
      %p187 = por %p185, %p186
      %p188 = scmp.ne.s32.totalorder %s179, %s180
      %p189 = scmp.eq.s32.totalorder %s22, 0
      %p190 = por %p188, %p189
      %p191 = scmp.ne.s32.totalorder %s179, %s180
      %p192 = scmp.eq.s32.totalorder %s23, 1
      %p193 = por %p191, %p192
      %p195 = scmp.ne.s32.totalorder %s180, %s194
      %p196 = scmp.eq.s32.totalorder %s23, 0
      %p197 = por %p195, %p196
      %s198 = ssub.s32 %s17, %s24
      %p199 = scmp.eq.s32.totalorder %s198, 0
      %s201 = sadd.s32 %s200, 1
      %s202 = scalar_select %p199, %s200, %s201
      %p205 = pneg %p199
      %p206 = scmp.eq.s32.totalorder %s17, 1
      %p207 = por %p205, %p206
      %p208 = scmp.ne.s32.totalorder %s200, %s203
      %p209 = scmp.eq.s32.totalorder %s17, 0
      %p210 = por %p208, %p209
      %p211 = scmp.ne.s32.totalorder %s200, %s203
      %p212 = scmp.eq.s32.totalorder %s22, 1
      %p213 = por %p211, %p212
      %p214 = scmp.ne.s32.totalorder %s203, %s204
      %p215 = scmp.eq.s32.totalorder %s22, 0
      %p216 = por %p214, %p215
      %p217 = scmp.ne.s32.totalorder %s203, %s204
      %p218 = scmp.eq.s32.totalorder %s23, 1
      %p219 = por %p217, %p218
      %p221 = scmp.ne.s32.totalorder %s204, %s220
      %p222 = scmp.eq.s32.totalorder %s23, 0
      %p223 = por %p221, %p222
      %p224 = scmp.le.s32.totalorder 1, %s17
      %p225 = scmp.lt.s32.totalorder %s17, 3
      %p226 = pnand %p224, %p225
      %p227 = pneg %p226
      // Predicated region
      $region9: #{tpu_custom_call.1} parent=5 // pred_check
        _
      $region10: #{tpu_custom_call.1} parent=5 // pred_check_branch
        %229 = sbr.rel (%p226) target = $region12
      $region11: #{tpu_custom_call.1} parent=5 // pred_region
        %s230 = ssub.s32 %s17, 1
        // Predicated region
        $region13: #{tpu_custom_call.1} parent=11 // pred_check
          %p231 = pneg %p64
        $region14: #{tpu_custom_call.1} parent=11 // pred_check_branch
          %233 = sbr.rel (%p231) target = $region16
        $region15: #{tpu_custom_call.1} parent=11 // pred_region
          _
        $region16: #{tpu_custom_call.1} parent=11 // pred_fallthru
          _
        // Predicated region
        $region17: #{tpu_custom_call.1} parent=11 // pred_check
          %p234 = pneg %p85
        $region18: #{tpu_custom_call.1} parent=11 // pred_check_branch
          %236 = sbr.rel (%p234) target = $region20
        $region19: #{tpu_custom_call.1} parent=11 // pred_region
          _
        $region20: #{tpu_custom_call.1} parent=11 // pred_fallthru
          _
        // Predicated region
        $region21: #{tpu_custom_call.1} parent=11 // pred_check
          %p237 = pneg %p106
        $region22: #{tpu_custom_call.1} parent=11 // pred_check_branch
          %239 = sbr.rel (%p237) target = $region24
        $region23: #{tpu_custom_call.1} parent=11 // pred_region
          _
        $region24: #{tpu_custom_call.1} parent=11 // pred_fallthru
          _
        // Predicated region
        $region25: #{tpu_custom_call.1} parent=11 // pred_check
          %p240 = pneg %p127
        $region26: #{tpu_custom_call.1} parent=11 // pred_check_branch
          %242 = sbr.rel (%p240) target = $region28
        $region27: #{tpu_custom_call.1} parent=11 // pred_region
          _
        $region28: #{tpu_custom_call.1} parent=11 // pred_fallthru
          _
        // Predicated region
        $region29: #{tpu_custom_call.1} parent=11 // pred_check
          %p243 = pneg %p148
        $region30: #{tpu_custom_call.1} parent=11 // pred_check_branch
          %245 = sbr.rel (%p243) target = $region32
        $region31: #{tpu_custom_call.1} parent=11 // pred_region
          _
        $region32: #{tpu_custom_call.1} parent=11 // pred_fallthru
          _
        // Predicated region
        $region33: #{tpu_custom_call.1} parent=11 // pred_check
          %p246 = pneg %p169
        $region34: #{tpu_custom_call.1} parent=11 // pred_check_branch
          %248 = sbr.rel (%p246) target = $region36
        $region35: #{tpu_custom_call.1} parent=11 // pred_region
          _
        $region36: #{tpu_custom_call.1} parent=11 // pred_fallthru
          _
        // Predicated region
        $region37: #{tpu_custom_call.1} parent=11 // pred_check
          %p249 = pneg %p190
        $region38: #{tpu_custom_call.1} parent=11 // pred_check_branch
          %251 = sbr.rel (%p249) target = $region40
        $region39: #{tpu_custom_call.1} parent=11 // pred_region
          _
        $region40: #{tpu_custom_call.1} parent=11 // pred_fallthru
          _
      $region12: #{tpu_custom_call.1} parent=5 // pred_fallthru
        _
      %p252 = scmp.lt.s32.totalorder %s17, 2
      // Predicated region
      $region41: #{tpu_custom_call.1} parent=5 // pred_check
        %p253 = pneg %p252
      $region42: #{tpu_custom_call.1} parent=5 // pred_check_branch
        %255 = sbr.rel (%p253) target = $region44
      $region43: #{tpu_custom_call.1} parent=5 // pred_region
        // Predicated region
        $region45: #{tpu_custom_call.1} parent=43 // pred_check
          %p256 = pneg %p37
        $region46: #{tpu_custom_call.1} parent=43 // pred_check_branch
          %258 = sbr.rel (%p256) target = $region48
        $region47: #{tpu_custom_call.1} parent=43 // pred_region
          %p259 = scmp.lt.s32.totalorder %s17, 1
          %s260 = scalar_select %p259, %s17, 1
          %s261 = smul.addr %s260, 15
          %s262 = smul.addr %s261, 4
          %s263 = scalar_lea.vmem %s0, %s262
        $region48: #{tpu_custom_call.1} parent=43 // pred_fallthru
          _
      $region44: #{tpu_custom_call.1} parent=5 // pred_fallthru
        _
      %p264 = scmp.le.s32.totalorder 1, %s17
      %p265 = scmp.lt.s32.totalorder %s17, 3
      %p266 = pnand %p264, %p265
      %p267 = pneg %p266
      // Predicated region
      $region49: #{tpu_custom_call.1} parent=5 // pred_check
        _
      $region50: #{tpu_custom_call.1} parent=5 // pred_check_branch
        %269 = sbr.rel (%p266) target = $region52
      $region51: #{tpu_custom_call.1} parent=5 // pred_region
        %s270 = ssub.s32 %s17, 1
        %p271 = scmp.lt.s32.totalorder %s22, 1
        %s272 = scalar_select %p271, %s22, 1
        %s273 = smul.addr %s272, 15
        %s274 = smul.addr %s273, 4
        %s275 = scalar_lea.vmem %s0, %s274
        %p276 = pneg %p43
        %p277 = pneg %p40
        %p278 = pneg %p64
        %p279 = pneg %p61
        %p280 = pneg %p85
        %p281 = pneg %p82
        %p282 = pneg %p106
        %p283 = pneg %p103
        %p284 = pneg %p127
        %p285 = pneg %p124
        %p286 = pneg %p148
        %p287 = pneg %p145
        %p288 = pneg %p169
        %p289 = pneg %p166
        %p290 = pneg %p190
        %p291 = pneg %p187
        %p292 = pneg %p216
        %p293 = pneg %p213
        %s294 = sand.u32 %s203, 1
        %s295 = scalar_lea.sflag [#allocation4], %s294
        %s296 = sand.u32 %s203, 1
        %s297 = smul.addr %s296, 12
        %s298 = scalar_lea.vmem [#allocation3], %s297
        %p299 = scmp.lt.s32.totalorder %s22, 1
        %s300 = scalar_select %p299, %s22, 1
        %s301 = smul.addr %s300, 15
        %s302 = smul.addr %s301, 4
        %s303 = scalar_lea.vmem %s0, %s302
        %p305 = scmp.eq.s32.totalorder %s22, 0
        // Predicated region
        $region53: #{tpu_custom_call.1} parent=51 // pred_check
          %p306 = pneg %p305
        $region54: #{tpu_custom_call.1} parent=51 // pred_check_branch
          %308 = sbr.rel (%p306) target = $region56
        $region55: #{tpu_custom_call.1} parent=51 // pred_region
          %309 = vst [vmem:[#allocation2] sm:$0xff] 0.0
          %310 = vst [vmem:[#allocation2 + $0x8] sm:$0xff] 0.0
          %311 = vst [vmem:[#allocation2 + $0x10] sm:$0xff] 0.0
          %312 = vst [vmem:[#allocation2 + $0x18] sm:$0xff] 0.0
          %313 = vst [vmem:[#allocation2 + $0x20] sm:$0xff] 0.0
          %314 = vst [vmem:[#allocation2 + $0x28] sm:$0xff] 0.0
          %315 = vst [vmem:[#allocation2 + $0x30] sm:$0xff] 0.0
          %316 = vst [vmem:[#allocation2 + $0x38] sm:$0xff] 0.0
          %317 = vst [vmem:[#allocation2 + $0x40] sm:$0xff] 0.0
          %318 = vst [vmem:[#allocation2 + $0x48] sm:$0xff] 0.0
          %319 = vst [vmem:[#allocation2 + $0x50] sm:$0xff] 0.0
          %320 = vst [vmem:[#allocation2 + $0x58] sm:$0xff] 0.0
          %321 = vst [vmem:[#allocation2 + $0x60] sm:$0xff] 0.0
          %322 = vst [vmem:[#allocation2 + $0x68] sm:$0xff] 0.0
          %323 = vst [vmem:[#allocation2 + $0x70] sm:$0xff] 0.0
          %324 = vst [vmem:[#allocation2 + $0x78] sm:$0xff] 0.0
          %325 = vst [vmem:[#allocation2 + $0x80] sm:$0xff] 0.0
          %326 = vst [vmem:[#allocation2 + $0x88] sm:$0xff] 0.0
          %327 = vst [vmem:[#allocation2 + $0x90] sm:$0xff] 0.0
          %328 = vst [vmem:[#allocation2 + $0x98] sm:$0xff] 0.0
          %329 = vst [vmem:[#allocation2 + $0xa0] sm:$0xff] 0.0
          %330 = vst [vmem:[#allocation2 + $0xa8] sm:$0xff] 0.0
          %331 = vst [vmem:[#allocation2 + $0xb0] sm:$0xff] 0.0
          %332 = vst [vmem:[#allocation2 + $0xb8] sm:$0xff] 0.0
          %333 = vst [vmem:[#allocation2 + $0xc0] sm:$0xff] 0.0
          %334 = vst [vmem:[#allocation2 + $0xc8] sm:$0xff] 0.0
          %335 = vst [vmem:[#allocation2 + $0xd0] sm:$0xff] 0.0
          %336 = vst [vmem:[#allocation2 + $0xd8] sm:$0xff] 0.0
          %337 = vst [vmem:[#allocation2 + $0xe0] sm:$0xff] 0.0
          %338 = vst [vmem:[#allocation2 + $0xe8] sm:$0xff] 0.0
          %339 = vst [vmem:[#allocation2 + $0xf0] sm:$0xff] 0.0
          %340 = vst [vmem:[#allocation2 + $0xf8] sm:$0xff] 0.0
          %341 = vst [vmem:[#allocation2 + $0x100] sm:$0xff] 0.0
          %342 = vst [vmem:[#allocation2 + $0x108] sm:$0xff] 0.0
          %343 = vst [vmem:[#allocation2 + $0x110] sm:$0xff] 0.0
          %344 = vst [vmem:[#allocation2 + $0x118] sm:$0xff] 0.0
          %345 = vst [vmem:[#allocation2 + $0x120] sm:$0xff] 0.0
          %346 = vst [vmem:[#allocation2 + $0x128] sm:$0xff] 0.0
          %347 = vst [vmem:[#allocation2 + $0x130] sm:$0xff] 0.0
          %348 = vst [vmem:[#allocation2 + $0x138] sm:$0xff] 0.0
          %349 = vst [vmem:[#allocation2 + $0x140] sm:$0xff] 0.0
          %350 = vst [vmem:[#allocation2 + $0x148] sm:$0xff] 0.0
          %351 = vst [vmem:[#allocation2 + $0x150] sm:$0xff] 0.0
          %352 = vst [vmem:[#allocation2 + $0x158] sm:$0xff] 0.0
          %353 = vst [vmem:[#allocation2 + $0x160] sm:$0xff] 0.0
        $region56: #{tpu_custom_call.1} parent=51 // pred_fallthru
          _
        %v354 = vld [vmem:[%s7] sm:$0x7]
        %v355 = vld [vmem:[%s1] sm:$0xf]
        %v356 = vld [vmem:[%s303] sm:$0xff]
        %v357 = vld [vmem:[%s303 + $0x8] sm:$0xf]
        %v358 = vld [vmem:[%s303 + $0xc] sm:$0xff]
        %v359 = vld [vmem:[%s303 + $0x14] sm:$0xf]
        %v360 = vld [vmem:[%s303 + $0x18] sm:$0xff]
        %v361 = vld [vmem:[%s303 + $0x20] sm:$0xf]
        %v362 = vld [vmem:[%s303 + $0x24] sm:$0xff]
        %v363 = vld [vmem:[%s303 + $0x2c] sm:$0xf]
        %v364 = vld [vmem:[%s303 + $0x30] sm:$0x33]
        %v365 = vld [vmem:[%s303 + $0x38] sm:$0x3]
        %v376 = vunpack.c.l.b16 %v356
        %v377 = vunpack.c.h.b16 %v356
        %v378 = vunpack.c.l.b16 %v357
        %v379 = vunpack.c.l.b16 %v358
        %v380 = vunpack.c.h.b16 %v358
        %v381 = vunpack.c.l.b16 %v359
        %v382 = vunpack.c.l.b16 %v360
        %v383 = vunpack.c.h.b16 %v360
        %v384 = vunpack.c.l.b16 %v361
        %v385 = vunpack.c.l.b16 %v362
        %v386 = vunpack.c.h.b16 %v362
        %v387 = vunpack.c.l.b16 %v363
        %v388 = vunpack.c.l.b16 %v364
        %v389 = vunpack.c.h.b16 %v364
        %v390 = vunpack.c.l.b16 %v365
        %v391 = vpack.c.b16 %v379, %v376
        %v392 = vpack.c.b16 %v380, %v377
        %v393 = vpack.c.b16 %v381, %v378
        %v394 = vpack.c.b16 %v385, %v382
        %v395 = vpack.c.b16 %v386, %v383
        %v396 = vpack.c.b16 %v387, %v384
        %v397 = vpack.c.b16 %v388, %v388
        %v398 = vpack.c.b16 %v389, %v389
        %v399 = vpack.c.b16 %v390, %v390
        %vm406 = vcmask 293888
        %v408 = vsel %vm406, %v355, 0
        %vm410 = vcmask 1041408
        %v412 = vsel %vm410, %v397, 0
        %v415 = vsel %vm410, %v398, 0
        %v418 = vsel %vm410, %v399, 0
        %420 = vmatprep.subr.bf16.mxu0 %v392
        %421 = vmatpush1.bf16.msra.mxu0 %v391
        %422 = vmatprep.subr.bf16.mxu0 %v395
        %423 = vmatpush1.bf16.msra.mxu0 %v394
        %424 = vmatprep.subr.bf16.mxu0 %v415
        %425 = vmatpush1.bf16.msra.mxu0 %v412
        %426 = vmatprep.subr.bf16.mxu0 0
        %427 = vmatpush1.bf16.msra.mxu0 0
        %428 = vmatprep.subr.bf16.mxu0 0
        %429 = vmatpush1.bf16.msra.mxu0 0
        %430 = vmatprep.subr.bf16.mxu0 0
        %431 = vmatpush1.bf16.msra.mxu0 0
        %432 = vmatprep.subr.bf16.mxu0 0
        %433 = vmatpush1.bf16.msra.mxu0 0
        %434 = vmatprep.subr.bf16.mxu0 0
        %435 = vmatpush1.bf16.msra.mxu0 0
        %436 = vmatprep.subr.bf16.mxu0 0
        %437 = vmatpush1.bf16.msra.mxu0 0
        %438 = vmatprep.subr.bf16.mxu0 0
        %439 = vmatpush1.bf16.msra.mxu0 0
        %440 = vmatprep.subr.bf16.mxu0 0
        %441 = vmatpush1.bf16.msra.mxu0 0
        %442 = vmatprep.subr.bf16.mxu0 0
        %443 = vmatpush1.bf16.msra.mxu0 0
        %444 = vmatprep.subr.bf16.mxu0 0
        %445 = vmatpush1.bf16.msra.mxu0 0
        %446 = vmatprep.subr.bf16.mxu0 0
        %447 = vmatpush1.bf16.msra.mxu0 0
        %448 = vmatprep.subr.bf16.mxu0 0
        %449 = vmatpush1.bf16.msra.mxu0 0
        %450 = vmatprep.subr.bf16.mxu0 0
        %451 = vmatpush1.bf16.msra.mxu0 0
        %452 = vmatprep.mubr.bf16.mxu0 0
        %453 = vmatmul.mubr.bf16.gmra.mrb[0].mxu0 %v408
        %v454 = vpop.f32.mrb[0].mxu0
        %v455 = vadd.f32 0.0, %v454
        %v456 = vpop.f32.mrb[0].mxu0
        %v457 = vadd.f32 0.0, %v456
        %v458 = vpop.f32.mrb[0].mxu0
        %v459 = vpop.f32.mrb[0].mxu0
        %460 = vdwg.mxu0
        %461 = vmatprep.subr.bf16.mxu0 0
        %462 = vmatpush1.bf16.msra.mxu0 %v393
        %463 = vmatprep.subr.bf16.mxu0 0
        %464 = vmatpush1.bf16.msra.mxu0 %v396
        %465 = vmatprep.subr.bf16.mxu0 0
        %466 = vmatpush1.bf16.msra.mxu0 %v418
        %467 = vmatprep.subr.bf16.mxu0 0
        %468 = vmatpush1.bf16.msra.mxu0 0
        %469 = vmatprep.subr.bf16.mxu0 0
        %470 = vmatpush1.bf16.msra.mxu0 0
        %471 = vmatprep.subr.bf16.mxu0 0
        %472 = vmatpush1.bf16.msra.mxu0 0
        %473 = vmatprep.subr.bf16.mxu0 0
        %474 = vmatpush1.bf16.msra.mxu0 0
        %475 = vmatprep.subr.bf16.mxu0 0
        %476 = vmatpush1.bf16.msra.mxu0 0
        %477 = vmatprep.subr.bf16.mxu0 0
        %478 = vmatpush1.bf16.msra.mxu0 0
        %479 = vmatprep.subr.bf16.mxu0 0
        %480 = vmatpush1.bf16.msra.mxu0 0
        %481 = vmatprep.subr.bf16.mxu0 0
        %482 = vmatpush1.bf16.msra.mxu0 0
        %483 = vmatprep.subr.bf16.mxu0 0
        %484 = vmatpush1.bf16.msra.mxu0 0
        %485 = vmatprep.subr.bf16.mxu0 0
        %486 = vmatpush1.bf16.msra.mxu0 0
        %487 = vmatprep.subr.bf16.mxu0 0
        %488 = vmatpush1.bf16.msra.mxu0 0
        %489 = vmatprep.subr.bf16.mxu0 0
        %490 = vmatpush1.bf16.msra.mxu0 0
        %491 = vmatprep.subr.bf16.mxu0 0
        %492 = vmatpush1.bf16.msra.mxu0 0
        %493 = vmatprep.mubr.bf16.mxu0 0
        %494 = vmatmul.mubr.bf16.gmra.mrb[0].mxu0 %v408
        %v495 = vpop.f32.mrb[0].mxu0
        %v496 = vadd.f32 0.0, %v495
        %v497 = vpop.f32.mrb[0].mxu0
        %v498 = vpop.f32.mrb[0].mxu0
        %v499 = vpop.f32.mrb[0].mxu0
        %500 = vdwg.mxu0
        %v501 = vld [vmem:[%s2] sm:$0xff]
        %503 = vset.pattern.permute.xlu0 0
        %504 = vperm.xlu0 %503, %v501
        %v505 = vpop.permute.xlu0 %504
        %v507 = vmul.f32 %v455, %v505
        %v508 = vmul.f32 %v457, %v505
        %v509 = vmul.f32 %v496, %v505
        %v510 = vld [vmem:[%s3] sm:$0xff]
        %512 = vset.pattern.permute.xlu0 0
        %513 = vperm.xlu0 %512, %v510
        %v514 = vpop.permute.xlu0 %513
        %v516 = vadd.f32 %v507, %v514
        %v517 = vadd.f32 %v508, %v514
        %v518 = vadd.f32 %v509, %v514
        %v519 = vmax.f32 %v516, 0.0
        %v520 = vmax.f32 %v517, 0.0
        %v521 = vmax.f32 %v518, 0.0
        %v522 = vunpack.c.l.bf16 %v354
        %v524 = vlaneseq
        %v525 = vshrl.u32 %v524, 7
        %v526 = vsub.s32 0, %v525
        %v527 = vrot.slane %v522, %v526
        %v528 = vlaneseq
        %v529 = vshrl.u32 %v528, 7
        %v530 = vsub.s32 2, %v529
        %v531 = vrot.slane %v522, %v530
        %v532 = vlaneseq
        %v533 = vshrl.u32 %v532, 7
        %v534 = vsub.s32 4, %v533
        %v535 = vrot.slane %v522, %v534
        %v539 = vlaneseq
        %v540 = vshrl.u32 %v539, 7
        %v541 = vsub.s32 0, %v540
        %v542 = vrot.slane %v527, %v541
        %v543 = vlaneseq
        %v544 = vshrl.u32 %v543, 7
        %v545 = vsub.s32 0, %v544
        %v546 = vrot.slane %v531, %v545
        %v547 = vlaneseq
        %v548 = vshrl.u32 %v547, 7
        %v549 = vsub.s32 0, %v548
        %v550 = vrot.slane %v535, %v549
        %v551 = vmul.f32 %v519, %v542
        %v552 = vmul.f32 %v520, %v546
        %v553 = vmul.f32 %v521, %v550
        %557 = vrot.lane.b32.xlu0 %v551, 19
        %v558 = vpop.permute.xlu0 %557
        %559 = vrot.lane.b32.xlu0 %v552, 19
        %v560 = vpop.permute.xlu0 %559
        %561 = vrot.lane.b32.xlu0 %v553, 19
        %v562 = vpop.permute.xlu0 %561
        %vm563 = vcmask 154624
        %v564 = vsel %vm563, %v558, %v560
        %v565 = vsel %vm563, %v560, %v562
        %vm570 = vcmask 1047704
        %571 = vst.msk [vmem:[#allocation2 + $0x8] sm:$0xff] %vm570, %v558
        %572 = vst [vmem:[#allocation2 + $0x10] sm:$0xff] %v564
        %573 = vst [vmem:[#allocation2 + $0x18] sm:$0xff] %v565
        %574 = vst.msk [vmem:[#allocation2 + $0x20] sm:$0xff] %vm563, %v562
        %575 = vrot.lane.b32.xlu0 %v551, 18
        %v576 = vpop.permute.xlu0 %575
        %577 = vrot.lane.b32.xlu0 %v552, 18
        %v578 = vpop.permute.xlu0 %577
        %579 = vrot.lane.b32.xlu0 %v553, 18
        %v580 = vpop.permute.xlu0 %579
        %vm581 = vcmask 146432
        %v582 = vsel %vm581, %v576, %v578
        %v583 = vsel %vm581, %v578, %v580
        %vm588 = vcmask 1047696
        %589 = vst.msk [vmem:[#allocation2 + $0x30] sm:$0xff] %vm588, %v576
        %590 = vst [vmem:[#allocation2 + $0x38] sm:$0xff] %v582
        %591 = vst [vmem:[#allocation2 + $0x40] sm:$0xff] %v583
        %592 = vst.msk [vmem:[#allocation2 + $0x48] sm:$0xff] %vm581, %v580
        %593 = vrot.lane.b32.xlu0 %v551, 17
        %v594 = vpop.permute.xlu0 %593
        %595 = vrot.lane.b32.xlu0 %v552, 17
        %v596 = vpop.permute.xlu0 %595
        %597 = vrot.lane.b32.xlu0 %v553, 17
        %v598 = vpop.permute.xlu0 %597
        %vm599 = vcmask 138240
        %v600 = vsel %vm599, %v594, %v596
        %v601 = vsel %vm599, %v596, %v598
        %vm606 = vcmask 1047688
        %607 = vst.msk [vmem:[#allocation2 + $0x58] sm:$0xff] %vm606, %v594
        %608 = vst [vmem:[#allocation2 + $0x60] sm:$0xff] %v600
        %609 = vst [vmem:[#allocation2 + $0x68] sm:$0xff] %v601
        %610 = vst.msk [vmem:[#allocation2 + $0x70] sm:$0xff] %vm599, %v598
        %611 = vrot.lane.b32.xlu0 %v551, 1
        %v612 = vpop.permute.xlu0 %611
        %613 = vrot.lane.b32.xlu0 %v552, 1
        %v614 = vpop.permute.xlu0 %613
        %615 = vrot.lane.b32.xlu0 %v553, 1
        %v616 = vpop.permute.xlu0 %615
        %vm617 = vcmask 7168
        %v618 = vsel %vm617, %v612, %v614
        %v619 = vsel %vm617, %v614, %v616
        %vm624 = vcmask 1047560
        %625 = vst.msk [vmem:[#allocation2 + $0x80] sm:$0xff] %vm624, %v612
        %626 = vst [vmem:[#allocation2 + $0x88] sm:$0xff] %v618
        %627 = vst [vmem:[#allocation2 + $0x90] sm:$0xff] %v619
        %628 = vst.msk [vmem:[#allocation2 + $0x98] sm:$0xff] %vm617, %v616
        %629 = vst [vmem:[#allocation2 + $0xa8] sm:$0xff] %v551
        %630 = vst [vmem:[#allocation2 + $0xb0] sm:$0xff] %v552
        %631 = vst [vmem:[#allocation2 + $0xb8] sm:$0xff] %v553
        %632 = vrot.lane.b32.xlu0 %v551, 127
        %v633 = vpop.permute.xlu0 %632
        %634 = vrot.lane.b32.xlu0 %v552, 127
        %v635 = vpop.permute.xlu0 %634
        %636 = vrot.lane.b32.xlu0 %v553, 127
        %v637 = vpop.permute.xlu0 %636
        %vm638 = vcmask 1039360
        %v639 = vsel %vm638, %v633, %v635
        %v640 = vsel %vm638, %v635, %v637
        %vm645 = vcmask 1048568
        %646 = vst.msk [vmem:[#allocation2 + $0xc8] sm:$0xff] %vm645, %v633
        %647 = vst [vmem:[#allocation2 + $0xd0] sm:$0xff] %v639
        %648 = vst [vmem:[#allocation2 + $0xd8] sm:$0xff] %v640
        %649 = vst.msk [vmem:[#allocation2 + $0xe0] sm:$0xff] %vm638, %v637
        %650 = vrot.lane.b32.xlu0 %v551, 111
        %v651 = vpop.permute.xlu0 %650
        %652 = vrot.lane.b32.xlu0 %v552, 111
        %v653 = vpop.permute.xlu0 %652
        %654 = vrot.lane.b32.xlu0 %v553, 111
        %v655 = vpop.permute.xlu0 %654
        %vm656 = vcmask 908288
        %v657 = vsel %vm656, %v651, %v653
        %v658 = vsel %vm656, %v653, %v655
        %vm663 = vcmask 1048440
        %664 = vst.msk [vmem:[#allocation2 + $0xf0] sm:$0xff] %vm663, %v651
        %665 = vst [vmem:[#allocation2 + $0xf8] sm:$0xff] %v657
        %666 = vst [vmem:[#allocation2 + $0x100] sm:$0xff] %v658
        %667 = vst.msk [vmem:[#allocation2 + $0x108] sm:$0xff] %vm656, %v655
        %668 = vrot.lane.b32.xlu0 %v551, 110
        %v669 = vpop.permute.xlu0 %668
        %670 = vrot.lane.b32.xlu0 %v552, 110
        %v671 = vpop.permute.xlu0 %670
        %672 = vrot.lane.b32.xlu0 %v553, 110
        %v673 = vpop.permute.xlu0 %672
        %vm674 = vcmask 900096
        %v675 = vsel %vm674, %v669, %v671
        %v676 = vsel %vm674, %v671, %v673
        %vm681 = vcmask 1048432
        %682 = vst.msk [vmem:[#allocation2 + $0x118] sm:$0xff] %vm681, %v669
        %683 = vst [vmem:[#allocation2 + $0x120] sm:$0xff] %v675
        %684 = vst [vmem:[#allocation2 + $0x128] sm:$0xff] %v676
        %685 = vst.msk [vmem:[#allocation2 + $0x130] sm:$0xff] %vm674, %v673
        %686 = vrot.lane.b32.xlu0 %v551, 109
        %v687 = vpop.permute.xlu0 %686
        %688 = vrot.lane.b32.xlu0 %v552, 109
        %v689 = vpop.permute.xlu0 %688
        %690 = vrot.lane.b32.xlu0 %v553, 109
        %v691 = vpop.permute.xlu0 %690
        %vm692 = vcmask 891904
        %v693 = vsel %vm692, %v687, %v689
        %v694 = vsel %vm692, %v689, %v691
        %vm699 = vcmask 1048424
        %700 = vst.msk [vmem:[#allocation2 + $0x140] sm:$0xff] %vm699, %v687
        %701 = vst [vmem:[#allocation2 + $0x148] sm:$0xff] %v693
        %702 = vst [vmem:[#allocation2 + $0x150] sm:$0xff] %v694
        %703 = vst.msk [vmem:[#allocation2 + $0x158] sm:$0xff] %vm692, %v691
        %v704 = vld [vmem:[%s4] sm:$0xff]
        %v705 = vld [vmem:[#allocation2 + $0x8] sm:$0xff]
        %v706 = vld [vmem:[#allocation2 + $0x10] sm:$0xff]
        %v707 = vld [vmem:[#allocation2 + $0x18] sm:$0xff]
        %v708 = vld [vmem:[#allocation2 + $0x30] sm:$0xff]
        %v709 = vld [vmem:[#allocation2 + $0x38] sm:$0xff]
        %v710 = vld [vmem:[#allocation2 + $0x40] sm:$0xff]
        %v711 = vld [vmem:[#allocation2 + $0x58] sm:$0xff]
        %v712 = vld [vmem:[#allocation2 + $0x60] sm:$0xff]
        %v713 = vld [vmem:[#allocation2 + $0x68] sm:$0xff]
        %v714 = vld [vmem:[#allocation2 + $0x80] sm:$0xff]
        %v715 = vld [vmem:[#allocation2 + $0x88] sm:$0xff]
        %v716 = vld [vmem:[#allocation2 + $0x90] sm:$0xff]
        %v717 = vld [vmem:[#allocation2 + $0xa8] sm:$0xff]
        %v718 = vld [vmem:[#allocation2 + $0xb0] sm:$0xff]
        %v719 = vld [vmem:[#allocation2 + $0xb8] sm:$0xff]
        %v720 = vld [vmem:[#allocation2 + $0xd0] sm:$0xff]
        %v721 = vld [vmem:[#allocation2 + $0xd8] sm:$0xff]
        %v722 = vld [vmem:[#allocation2 + $0xe0] sm:$0xff]
        %v723 = vld [vmem:[#allocation2 + $0xf8] sm:$0xff]
        %v724 = vld [vmem:[#allocation2 + $0x100] sm:$0xff]
        %v725 = vld [vmem:[#allocation2 + $0x108] sm:$0xff]
        %v726 = vld [vmem:[#allocation2 + $0x120] sm:$0xff]
        %v727 = vld [vmem:[#allocation2 + $0x128] sm:$0xff]
        %v728 = vld [vmem:[#allocation2 + $0x130] sm:$0xff]
        %v729 = vld [vmem:[#allocation2 + $0x148] sm:$0xff]
        %v730 = vld [vmem:[#allocation2 + $0x150] sm:$0xff]
        %v731 = vld [vmem:[#allocation2 + $0x158] sm:$0xff]
        %vm732 = vcmask 588800
        %v734 = vsel %vm732, %v704, 0
        %736 = vmatprep.subr.mxu0 %v706
        %737 = vmatpush1.msra.mxu0 %v705
        %738 = vmatprep.subr.mxu0 %v709
        %739 = vmatpush1.msra.mxu0 %v708
        %740 = vmatprep.subr.mxu0 %v712
        %741 = vmatpush1.msra.mxu0 %v711
        %742 = vmatprep.subr.mxu0 %v715
        %743 = vmatpush1.msra.mxu0 %v714
        %744 = vmatprep.subr.mxu0 %v718
        %745 = vmatpush1.msra.mxu0 %v717
        %746 = vmatprep.subr.mxu0 %v721
        %747 = vmatpush1.msra.mxu0 %v720
        %748 = vmatprep.subr.mxu0 %v724
        %749 = vmatpush1.msra.mxu0 %v723
        %750 = vmatprep.subr.mxu0 %v727
        %751 = vmatpush1.msra.mxu0 %v726
        %752 = vmatprep.subr.mxu0 %v730
        %753 = vmatpush1.msra.mxu0 %v729
        %754 = vmatprep.subr.mxu0 0.0
        %755 = vmatpush1.msra.mxu0 0.0
        %756 = vmatprep.subr.mxu0 0.0
        %757 = vmatpush1.msra.mxu0 0.0
        %758 = vmatprep.subr.mxu0 0.0
        %759 = vmatpush1.msra.mxu0 0.0
        %760 = vmatprep.subr.mxu0 0.0
        %761 = vmatpush1.msra.mxu0 0.0
        %762 = vmatprep.subr.mxu0 0.0
        %763 = vmatpush1.msra.mxu0 0.0
        %764 = vmatprep.subr.mxu0 0.0
        %765 = vmatpush1.msra.mxu0 0.0
        %766 = vmatprep.subr.mxu0 0.0
        %767 = vmatpush1.msra.mxu0 0.0
        %768 = vmatprep.subr.mxu0 0.0
        %769 = vmatpush1.msra.mxu0 0.0
        %770 = vmatprep.subr.mxu0 0.0
        %771 = vmatpush1.msra.mxu0 0.0
        %772 = vmatprep.subr.mxu0 0.0
        %773 = vmatpush1.msra.mxu0 0.0
        %774 = vmatprep.subr.mxu0 0.0
        %775 = vmatpush1.msra.mxu0 0.0
        %776 = vmatprep.subr.mxu0 0.0
        %777 = vmatpush1.msra.mxu0 0.0
        %778 = vmatprep.subr.mxu0 0.0
        %779 = vmatpush1.msra.mxu0 0.0
        %780 = vmatprep.subr.mxu0 0.0
        %781 = vmatpush1.msra.mxu0 0.0
        %782 = vmatprep.subr.mxu0 0.0
        %783 = vmatpush1.msra.mxu0 0.0
        %784 = vmatprep.subr.mxu0 0.0
        %785 = vmatpush1.msra.mxu0 0.0
        %786 = vmatprep.subr.mxu0 0.0
        %787 = vmatpush1.msra.mxu0 0.0
        %788 = vmatprep.subr.mxu0 0.0
        %789 = vmatpush1.msra.mxu0 0.0
        %790 = vmatprep.subr.mxu0 0.0
        %791 = vmatpush1.msra.mxu0 0.0
        %792 = vmatprep.subr.mxu0 0.0
        %793 = vmatpush1.msra.mxu0 0.0
        %794 = vmatprep.subr.mxu0 0.0
        %795 = vmatpush1.msra.mxu0 0.0
        %796 = vmatprep.subr.mxu0 0.0
        %797 = vmatpush1.msra.mxu0 0.0
        %798 = vmatprep.subr.mxu0 0.0
        %799 = vmatpush1.msra.mxu0 0.0
        %800 = vmatprep.mubr.f32.mxu0 0.0
        %801 = vmatmul.mubr.f32.gmra.mrb[0].mxu0 %v734
        %v802 = vpop.f32.mrb[0].mxu0
        %v803 = vadd.f32 0.0, %v802
        %v804 = vpop.f32.mrb[0].mxu0
        %v805 = vadd.f32 0.0, %v804
        %806 = vdwg.mxu0
        %807 = vmatprep.subr.mxu0 0.0
        %808 = vmatpush1.msra.mxu0 %v707
        %809 = vmatprep.subr.mxu0 0.0
        %810 = vmatpush1.msra.mxu0 %v710
        %811 = vmatprep.subr.mxu0 0.0
        %812 = vmatpush1.msra.mxu0 %v713
        %813 = vmatprep.subr.mxu0 0.0
        %814 = vmatpush1.msra.mxu0 %v716
        %815 = vmatprep.subr.mxu0 0.0
        %816 = vmatpush1.msra.mxu0 %v719
        %817 = vmatprep.subr.mxu0 0.0
        %818 = vmatpush1.msra.mxu0 %v722
        %819 = vmatprep.subr.mxu0 0.0
        %820 = vmatpush1.msra.mxu0 %v725
        %821 = vmatprep.subr.mxu0 0.0
        %822 = vmatpush1.msra.mxu0 %v728
        %823 = vmatprep.subr.mxu0 0.0
        %824 = vmatpush1.msra.mxu0 %v731
        %825 = vmatprep.subr.mxu0 0.0
        %826 = vmatpush1.msra.mxu0 0.0
        %827 = vmatprep.subr.mxu0 0.0
        %828 = vmatpush1.msra.mxu0 0.0
        %829 = vmatprep.subr.mxu0 0.0
        %830 = vmatpush1.msra.mxu0 0.0
        %831 = vmatprep.subr.mxu0 0.0
        %832 = vmatpush1.msra.mxu0 0.0
        %833 = vmatprep.subr.mxu0 0.0
        %834 = vmatpush1.msra.mxu0 0.0
        %835 = vmatprep.subr.mxu0 0.0
        %836 = vmatpush1.msra.mxu0 0.0
        %837 = vmatprep.subr.mxu0 0.0
        %838 = vmatpush1.msra.mxu0 0.0
        %839 = vmatprep.subr.mxu0 0.0
        %840 = vmatpush1.msra.mxu0 0.0
        %841 = vmatprep.subr.mxu0 0.0
        %842 = vmatpush1.msra.mxu0 0.0
        %843 = vmatprep.subr.mxu0 0.0
        %844 = vmatpush1.msra.mxu0 0.0
        %845 = vmatprep.subr.mxu0 0.0
        %846 = vmatpush1.msra.mxu0 0.0
        %847 = vmatprep.subr.mxu0 0.0
        %848 = vmatpush1.msra.mxu0 0.0
        %849 = vmatprep.subr.mxu0 0.0
        %850 = vmatpush1.msra.mxu0 0.0
        %851 = vmatprep.subr.mxu0 0.0
        %852 = vmatpush1.msra.mxu0 0.0
        %853 = vmatprep.subr.mxu0 0.0
        %854 = vmatpush1.msra.mxu0 0.0
        %855 = vmatprep.subr.mxu0 0.0
        %856 = vmatpush1.msra.mxu0 0.0
        %857 = vmatprep.subr.mxu0 0.0
        %858 = vmatpush1.msra.mxu0 0.0
        %859 = vmatprep.subr.mxu0 0.0
        %860 = vmatpush1.msra.mxu0 0.0
        %861 = vmatprep.subr.mxu0 0.0
        %862 = vmatpush1.msra.mxu0 0.0
        %863 = vmatprep.subr.mxu0 0.0
        %864 = vmatpush1.msra.mxu0 0.0
        %865 = vmatprep.subr.mxu0 0.0
        %866 = vmatpush1.msra.mxu0 0.0
        %867 = vmatprep.subr.mxu0 0.0
        %868 = vmatpush1.msra.mxu0 0.0
        %869 = vmatprep.subr.mxu0 0.0
        %870 = vmatpush1.msra.mxu0 0.0
        %871 = vmatprep.mubr.f32.mxu0 0.0
        %872 = vmatmul.mubr.f32.gmra.mrb[0].mxu0 %v734
        %v873 = vpop.f32.mrb[0].mxu0
        %v874 = vadd.f32 0.0, %v873
        %v875 = vpop.f32.mrb[0].mxu0
        %876 = vdwg.mxu0
        %v877 = vld [vmem:[%s5] sm:$0xff]
        %879 = vset.pattern.permute.xlu0 0
        %880 = vperm.xlu0 %879, %v877
        %v881 = vpop.permute.xlu0 %880
        %v883 = vmul.f32 %v803, %v881
        %v884 = vmul.f32 %v805, %v881
        %v885 = vmul.f32 %v874, %v881
        %v886 = vld [vmem:[%s6] sm:$0xff]
        %888 = vset.pattern.permute.xlu0 0
        %889 = vperm.xlu0 %888, %v886
        %v890 = vpop.permute.xlu0 %889
        %v892 = vadd.f32 %v883, %v890
        %v893 = vadd.f32 %v884, %v890
        %v894 = vadd.f32 %v885, %v890
        %v895 = vmax.f32 %v892, 0.0
        %v896 = vmax.f32 %v893, 0.0
        %v897 = vmax.f32 %v894, 0.0
        %v898 = vpack.c.bf16 %v895, %v895
        %v899 = vpack.c.bf16 %v896, %v896
        %v900 = vpack.c.bf16 %v897, %v897
        %v904 = vunpack.c.l.b16 %v898
        %v905 = vunpack.c.l.b16 %v899
        %v906 = vunpack.c.l.b16 %v900
        %v907 = vpack.c.b16 %v905, %v904
        %v908 = vpack.c.b16 %v906, %v906
        %911 = vst [vmem:[%s298] sm:$0xff] %v907
        %912 = vst [vmem:[%s298 + $0x8] sm:$0xf] %v908
        %s913 = sand.u32 %s203, 1
        %s914 = scalar_lea.sflag [#allocation4], %s913
        %s915 = sand.u32 %s203, 1
        %s916 = smul.addr %s915, 12
        %s917 = scalar_lea.vmem [#allocation3], %s916
        // Predicated region
        $region57: #{tpu_custom_call.1} parent=51 // pred_check
          %p918 = pneg %p213
        $region58: #{tpu_custom_call.1} parent=51 // pred_check_branch
          %920 = sbr.rel (%p918) target = $region60
        $region59: #{tpu_custom_call.1} parent=51 // pred_region
          %s922 = ssub.s32 192, 192
          %923 = vsyncadd %s914, %s922
          %s924 = smul.addr %s22, 3
          %s925 = smul.addr %s924, 64
          %s926 = scalar_lea.hbm %s8, %s925
          %s928 = sshll.u32 %s917, 4
          %s929 = int_to_ptr.vmem [resolvable:$true] %s928
          %931 = dma.vmem_to_hbm [thread:$0]  %s929, 192, %s926, %s914
        $region60: #{tpu_custom_call.1} parent=51 // pred_fallthru
          _
      $region52: #{tpu_custom_call.1} parent=5 // pred_fallthru
        _
      %p932 = scmp.le.s32.totalorder 2, %s17
      // Predicated region
      $region61: #{tpu_custom_call.1} parent=5 // pred_check
        %p933 = pneg %p932
      $region62: #{tpu_custom_call.1} parent=5 // pred_check_branch
        %935 = sbr.rel (%p933) target = $region64
      $region63: #{tpu_custom_call.1} parent=5 // pred_region
        %s936 = ssub.s32 %s17, 2
        // Predicated region
        $region65: #{tpu_custom_call.1} parent=63 // pred_check
          %p937 = pneg %p219
        $region66: #{tpu_custom_call.1} parent=63 // pred_check_branch
          %939 = sbr.rel (%p937) target = $region68
        $region67: #{tpu_custom_call.1} parent=63 // pred_region
          %s940 = sand.u32 %s204, 1
          %s941 = scalar_lea.sflag [#allocation4], %s940
          %s942 = sand.u32 %s204, 1
          %s943 = smul.addr %s942, 12
          %s944 = scalar_lea.vmem [#allocation3], %s943
          %945 = dma.done %s941, 192
        $region68: #{tpu_custom_call.1} parent=63 // pred_fallthru
          _
      $region64: #{tpu_custom_call.1} parent=5 // pred_fallthru
        _
    $region6: #{tpu_custom_call.1} parent=1 // loop_footer
      %s21 = sadd.s32 1, %s17
    $region7: #{tpu_custom_call.1} parent=1 // loop_footer_branch
      %16 = sbr.rel target = $region3
    $region8: #{tpu_custom_call.1} parent=1 // loop_exit
      _
    %946 = vsyncpa [#allocation4], 1
    %s947 = scalar_lea.sflag [#allocation4], 1
    %948 = vsyncpa %s947, 1

</llo_original>
